<compile_context>
chip_gen: v7x
topology: tpu7x:2x2x1
jax: 0.10.0
libtpu: 0.0.40
codegen_flags: <defaults>
</compile_context>

<pallas_src>
import jax
import jax.numpy as jnp
import numpy as np
from jax import lax
from jax.experimental import pallas as pl
from jax.experimental.pallas import tpu as pltpu

_LANE = 128   # padded feature width (lane-dense for D_in / H / P)
_NL = 5       # number of linear layers: branch (3) + trunk (2)


# ----------------------------------------------------------------------------
# Pallas kernel: one (tm, tn) tile of  einsum('bi,ni->bn', branch(x), trunk(x)) + b
# (the + b is pre-folded into the padded bias slab, see pack_params)
# ----------------------------------------------------------------------------
def _deeponet_kernel(xr_ref, xc_ref, w_ref, bias_ref, out_ref):
    xr = xr_ref[...]              # (tm, 128) rows feeding the branch net
    xc = xc_ref[...]              # (tn, 128) rows feeding the trunk net
    biases = bias_ref[...]        # (8, 128)

    # ---- branch net: layers 0, 1, 2 (tanh, tanh, linear) ----
    h = jnp.tanh(jnp.dot(xr, w_ref[0], preferred_element_type=jnp.float32) + biases[0:1, :])
    h = jnp.tanh(jnp.dot(h, w_ref[1], preferred_element_type=jnp.float32) + biases[1:2, :])
    x_func = jnp.dot(h, w_ref[2], preferred_element_type=jnp.float32) + biases[2:3, :]

    # ---- trunk net: layers 3, 4 (tanh, linear) ----
    t = jnp.tanh(jnp.dot(xc, w_ref[3], preferred_element_type=jnp.float32) + biases[3:4, :])
    x_loc = jnp.dot(t, w_ref[4], preferred_element_type=jnp.float32) + biases[4:5, :]

    # ---- combine: einsum('bi,ni->bn') as a trans_b matmul (no explicit transpose).
    # The folded-in column P carries x_func[:,P]=b, x_loc[:,P]=1 -> adds +b everywhere.
    out_ref[...] = lax.dot_general(
        x_func, x_loc,
        dimension_numbers=(((1,), (1,)), ((), ())),
        preferred_element_type=jnp.float32,
    )


# ----------------------------------------------------------------------------
# Host-side parameter packing (done once; zero-padded, lane-aligned slabs)
# ----------------------------------------------------------------------------
def pack_params(params):
    layers = [
        (params["bw1"], params["bb1"]),
        (params["bw2"], params["bb2"]),
        (params["bw3"], params["bb3"]),
        (params["tw1"], params["tb1"]),
        (params["tw2"], params["tb2"]),
    ]
    w_slab = jnp.zeros((_NL, _LANE, _LANE), jnp.float32)
    b_slab = jnp.zeros((8, _LANE), jnp.float32)     # 8 rows for sublane alignment
    for l, (w, b) in enumerate(layers):
        d_in, d_out = w.shape
        w_slab = w_slab.at[l, :d_in, :d_out].set(w.astype(jnp.float32))
        b_slab = b_slab.at[l, :d_out].set(b.reshape(-1).astype(jnp.float32))

    # Fold the scalar output bias `self.b` into the (zero) padded column P:
    #   x_func[:, P] = b (last branch layer is linear, zero weights in that col)
    #   x_loc [:, P] = 1 (last trunk layer is linear)
    # => combine contributes b * 1 = b to every output element.
    P = params["bw3"].shape[1]
    b_slab = b_slab.at[2, P].set(jnp.asarray(params["b"], jnp.float32))
    b_slab = b_slab.at[4, P].set(jnp.float32(1.0))
    return w_slab, b_slab


def _pick_tile(b):
    # Small batches: one full-extent block (always a legal block shape).
    if b <= 512:
        return b
    # Large batches: lane-dense tiles sized for v7x's 64 MiB VMEM (f32 output
    # tile <= 1024x1024 keeps double-buffering alive on all generations).
    for t in (1024, 512, 256, 128):
        if b % t == 0:
            return t
    return b


# ----------------------------------------------------------------------------
# Wrapper
# ----------------------------------------------------------------------------
def deeponet_forward(x, params):
    """x: (B, D_in) float32.  params: per-layer weights/biases + scalar b."""
    B, d_in = x.shape
    H = params["bw1"].shape[1]
    P = params["bw3"].shape[1]
    if not (d_in <= _LANE and H <= _LANE and P < _LANE):
        # TODO(synk): widths > 128 need a K-tiled variant; P == 128 needs the
        #             separate SMEM-scalar path for `b`.
        raise NotImplementedError("feature widths must fit in one 128-lane tile")

    w_slab, b_slab = pack_params(params)
    x_pad = jnp.zeros((B, _LANE), jnp.float32).at[:, :d_in].set(x.astype(jnp.float32))

    tm = _pick_tile(B)
    tn = _pick_tile(B)
    grid = (B // tm, B // tn)

    cost = pl.CostEstimate(
        flops=(2 * B * (d_in * H + H * H + H * P)       # branch MLP
               + 2 * B * (d_in * H + H * P)             # trunk MLP
               + 2 * B * B * P),                        # combine
        transcendentals=3 * B * H,                      # three tanh layers
        bytes_accessed=(2 * int(x_pad.size) * 4 + int(w_slab.size) * 4
                        + int(b_slab.size) * 4 + B * B * 4),
    )

    # NOTE: for large shapes on v6e/v7x, casting x_pad / w_slab to bf16 (while
    # keeping preferred_element_type=f32) roughly doubles MXU throughput; kept
    # in f32 here so the small-shape correctness check is tight.
    return pl.pallas_call(
        _deeponet_kernel,
        out_shape=jax.ShapeDtypeStruct((B, B), jnp.float32),
        grid=grid,
        in_specs=[
            pl.BlockSpec((tm, _LANE), lambda i, j: (i, 0)),             # x rows -> branch
            pl.BlockSpec((tn, _LANE), lambda i, j: (j, 0)),             # x rows -> trunk
            pl.BlockSpec((_NL, _LANE, _LANE), lambda i, j: (0, 0, 0)),  # weight slab
            pl.BlockSpec((8, _LANE), lambda i, j: (0, 0)),              # bias slab (b folded in)
        ],
        out_specs=pl.BlockSpec((tm, tn), lambda i, j: (i, j)),
        compiler_params=pltpu.CompilerParams(
            dimension_semantics=("parallel", "parallel")),
        cost_estimate=cost,
    )(x_pad, x_pad, w_slab, b_slab)


# ----------------------------------------------------------------------------
# Pure-JAX reference (correctness check)
# ----------------------------------------------------------------------------
def deeponet_ref(x, p):
    h = jnp.tanh(x @ p["bw1"] + p["bb1"])
    h = jnp.tanh(h @ p["bw2"] + p["bb2"])
    x_func = h @ p["bw3"] + p["bb3"]
    t = jnp.tanh(x @ p["tw1"] + p["tb1"])
    x_loc = t @ p["tw2"] + p["tb2"]
    return jnp.einsum("bi,ni->bn", x_func, x_loc) + p["b"]


# ----------------------------------------------------------------------------
# Deterministic parameter construction
# ----------------------------------------------------------------------------
def make_params(key, branch_layers, trunk_layers):
    def linear(k, d_in, d_out):
        kw, kb = jax.random.split(k)
        w = jax.random.normal(kw, (d_in, d_out), jnp.float32) * (1.0 / np.sqrt(d_in))
        b = jax.random.normal(kb, (1, d_out), jnp.float32) * 0.01
        return w, b

    keys = jax.random.split(key, 6)
    bw1, bb1 = linear(keys[0], branch_layers[0], branch_layers[1])
    bw2, bb2 = linear(keys[1], branch_layers[1], branch_layers[2])
    bw3, bb3 = linear(keys[2], branch_layers[2], branch_layers[3])
    tw1, tb1 = linear(keys[3], trunk_layers[0], trunk_layers[1])
    tw2, tb2 = linear(keys[4], trunk_layers[1], trunk_layers[2])
    b = jnp.array(0.25, jnp.float32)  # Parameter(torch.tensor(0.0)); nonzero to exercise the fold
    return dict(bw1=bw1, bb1=bb1, bw2=bw2, bb2=bb2, bw3=bw3, bb3=bb3,
                tw1=tw1, tb1=tb1, tw2=tw2, tb2=tb2, b=b)


if __name__ == "__main__":
    # Small shapes: batch=8, input dim=16, hidden=32, basis dim p=32.
    B, D_IN, H, P = 8, 16, 32, 32
    branch_layers = [D_IN, H, H, P]
    trunk_layers = [D_IN, H, P]

    key = jax.random.PRNGKey(0)
    k_params, k_x = jax.random.split(key)
    params = make_params(k_params, branch_layers, trunk_layers)

    # forward(x) uses x[0] for BOTH branch and trunk; x_func is the only input needed.
    x_func = jax.random.normal(k_x, (B, D_IN), jnp.float32)

    out = deeponet_forward(x_func, params)
    out = jax.block_until_ready(out)

    ref = deeponet_ref(x_func, params)
    np.testing.assert_allclose(np.asarray(out), np.asarray(ref), rtol=1e-5, atol=1e-5)

    print("KERNEL_OK")
</pallas_src>

<mosaic_0001>
module attributes {stable_mosaic.version = 11 : i64} {
  func.func @_deeponet_kernel(%arg0: i32, %arg1: i32, %arg2: memref<8x128xf32, #tpu.memory_space<vmem>>, %arg3: memref<8x128xf32, #tpu.memory_space<vmem>>, %arg4: memref<5x128x128xf32, #tpu.memory_space<vmem>>, %arg5: memref<8x128xf32, #tpu.memory_space<vmem>>, %arg6: memref<8x8xf32, #tpu.memory_space<vmem>>) attributes {dimension_semantics = [#tpu.dimension_semantics<parallel>, #tpu.dimension_semantics<parallel>], iteration_bounds = array<i64: 1, 1>, scalar_prefetch = 0 : i64, scratch_operands = 0 : i64, tpu.core_type = #tpu.core_type<tc>, window_params = [{transform_indices = @transform_0, window_bounds = array<i64: 8, 128>}, {transform_indices = @transform_1, window_bounds = array<i64: 8, 128>}, {pipeline_mode = #tpu.pipeline_mode<synchronous>, transform_indices = @transform_2, window_bounds = array<i64: 5, 128, 128>}, {pipeline_mode = #tpu.pipeline_mode<synchronous>, transform_indices = @transform_3, window_bounds = array<i64: 8, 128>}, {transform_indices = @transform_4, window_bounds = array<i64: 8, 8>}]} {
    %c0 = arith.constant 0 : index
    %c0_0 = arith.constant 0 : index
    %0 = vector.load %arg2[%c0, %c0_0] : memref<8x128xf32, #tpu.memory_space<vmem>>, vector<8x128xf32>
    %c0_1 = arith.constant 0 : index
    %c0_2 = arith.constant 0 : index
    %1 = vector.load %arg3[%c0_1, %c0_2] : memref<8x128xf32, #tpu.memory_space<vmem>>, vector<8x128xf32>
    %c0_3 = arith.constant 0 : index
    %c0_4 = arith.constant 0 : index
    %2 = vector.load %arg5[%c0_3, %c0_4] : memref<8x128xf32, #tpu.memory_space<vmem>>, vector<8x128xf32>
    %c0_5 = arith.constant 0 : index
    %c0_6 = arith.constant 0 : index
    %c0_7 = arith.constant 0 : index
    %3 = vector.load %arg4[%c0_5, %c0_6, %c0_7] : memref<5x128x128xf32, #tpu.memory_space<vmem>>, vector<1x128x128xf32>
    %4 = vector.shape_cast %3 : vector<1x128x128xf32> to vector<128x128xf32>
    %cst = arith.constant dense<0.000000e+00> : vector<8x128xf32>
    %5 = tpu.matmul %0, %4, %cst {dimension_numbers = #tpu.dot_dimension_numbers<[1], [0], [0], [1], [0, 0, 1, 1], [], []>} : vector<8x128xf32>, vector<128x128xf32>, vector<8x128xf32> -> vector<8x128xf32>
    %6 = vector.extract_strided_slice %2 {offsets = [0, 0], sizes = [1, 128], strides = [1, 1]} : vector<8x128xf32> to vector<1x128xf32>
    %7 = vector.broadcast %6 : vector<1x128xf32> to vector<8x128xf32>
    %8 = arith.addf %5, %7 : vector<8x128xf32>
    %9 = math.tanh %8 : vector<8x128xf32>
    %c1 = arith.constant 1 : index
    %c0_8 = arith.constant 0 : index
    %c0_9 = arith.constant 0 : index
    %10 = vector.load %arg4[%c1, %c0_8, %c0_9] : memref<5x128x128xf32, #tpu.memory_space<vmem>>, vector<1x128x128xf32>
    %11 = vector.shape_cast %10 : vector<1x128x128xf32> to vector<128x128xf32>
    %cst_10 = arith.constant dense<0.000000e+00> : vector<8x128xf32>
    %12 = tpu.matmul %9, %11, %cst_10 {dimension_numbers = #tpu.dot_dimension_numbers<[1], [0], [0], [1], [0, 0, 1, 1], [], []>} : vector<8x128xf32>, vector<128x128xf32>, vector<8x128xf32> -> vector<8x128xf32>
    %13 = vector.extract_strided_slice %2 {offsets = [1, 0], sizes = [1, 128], strides = [1, 1]} : vector<8x128xf32> to vector<1x128xf32>
    %14 = vector.broadcast %13 : vector<1x128xf32> to vector<8x128xf32>
    %15 = arith.addf %12, %14 : vector<8x128xf32>
    %16 = math.tanh %15 : vector<8x128xf32>
    %c2 = arith.constant 2 : index
    %c0_11 = arith.constant 0 : index
    %c0_12 = arith.constant 0 : index
    %17 = vector.load %arg4[%c2, %c0_11, %c0_12] : memref<5x128x128xf32, #tpu.memory_space<vmem>>, vector<1x128x128xf32>
    %18 = vector.shape_cast %17 : vector<1x128x128xf32> to vector<128x128xf32>
    %cst_13 = arith.constant dense<0.000000e+00> : vector<8x128xf32>
    %19 = tpu.matmul %16, %18, %cst_13 {dimension_numbers = #tpu.dot_dimension_numbers<[1], [0], [0], [1], [0, 0, 1, 1], [], []>} : vector<8x128xf32>, vector<128x128xf32>, vector<8x128xf32> -> vector<8x128xf32>
    %20 = vector.extract_strided_slice %2 {offsets = [2, 0], sizes = [1, 128], strides = [1, 1]} : vector<8x128xf32> to vector<1x128xf32>
    %21 = vector.broadcast %20 : vector<1x128xf32> to vector<8x128xf32>
    %22 = arith.addf %19, %21 : vector<8x128xf32>
    %c3 = arith.constant 3 : index
    %c0_14 = arith.constant 0 : index
    %c0_15 = arith.constant 0 : index
    %23 = vector.load %arg4[%c3, %c0_14, %c0_15] : memref<5x128x128xf32, #tpu.memory_space<vmem>>, vector<1x128x128xf32>
    %24 = vector.shape_cast %23 : vector<1x128x128xf32> to vector<128x128xf32>
    %cst_16 = arith.constant dense<0.000000e+00> : vector<8x128xf32>
    %25 = tpu.matmul %1, %24, %cst_16 {dimension_numbers = #tpu.dot_dimension_numbers<[1], [0], [0], [1], [0, 0, 1, 1], [], []>} : vector<8x128xf32>, vector<128x128xf32>, vector<8x128xf32> -> vector<8x128xf32>
    %26 = vector.extract_strided_slice %2 {offsets = [3, 0], sizes = [1, 128], strides = [1, 1]} : vector<8x128xf32> to vector<1x128xf32>
    %27 = vector.broadcast %26 : vector<1x128xf32> to vector<8x128xf32>
    %28 = arith.addf %25, %27 : vector<8x128xf32>
    %29 = math.tanh %28 : vector<8x128xf32>
    %c4 = arith.constant 4 : index
    %c0_17 = arith.constant 0 : index
    %c0_18 = arith.constant 0 : index
    %30 = vector.load %arg4[%c4, %c0_17, %c0_18] : memref<5x128x128xf32, #tpu.memory_space<vmem>>, vector<1x128x128xf32>
    %31 = vector.shape_cast %30 : vector<1x128x128xf32> to vector<128x128xf32>
    %cst_19 = arith.constant dense<0.000000e+00> : vector<8x128xf32>
    %32 = tpu.matmul %29, %31, %cst_19 {dimension_numbers = #tpu.dot_dimension_numbers<[1], [0], [0], [1], [0, 0, 1, 1], [], []>} : vector<8x128xf32>, vector<128x128xf32>, vector<8x128xf32> -> vector<8x128xf32>
    %33 = vector.extract_strided_slice %2 {offsets = [4, 0], sizes = [1, 128], strides = [1, 1]} : vector<8x128xf32> to vector<1x128xf32>
    %34 = vector.broadcast %33 : vector<1x128xf32> to vector<8x128xf32>
    %35 = arith.addf %32, %34 : vector<8x128xf32>
    %cst_20 = arith.constant dense<0.000000e+00> : vector<8x8xf32>
    %36 = tpu.matmul %22, %35, %cst_20 {dimension_numbers = #tpu.dot_dimension_numbers<[1], [1], [0], [0], [0, 0, 1, 0], [], []>} : vector<8x128xf32>, vector<8x128xf32>, vector<8x8xf32> -> vector<8x8xf32>
    %c0_21 = arith.constant 0 : index
    %c0_22 = arith.constant 0 : index
    %37 = vector.load %arg6[%c0_21, %c0_22] : memref<8x8xf32, #tpu.memory_space<vmem>>, vector<8x8xf32>
    tpu.vector_store %arg6[%c0_21, %c0_22], %36 {strides = array<i32>} : memref<8x8xf32, #tpu.memory_space<vmem>>, vector<8x8xf32>,
    return
  }
  func.func @transform_0(%arg0: i32, %arg1: i32) -> (i32, i32) {
    %c0_i32 = arith.constant 0 : i32
    %c0_i32_0 = arith.constant 0 : i32
    return %arg0, %c0_i32 : i32, i32
  }
  func.func @transform_1(%arg0: i32, %arg1: i32) -> (i32, i32) {
    %c0_i32 = arith.constant 0 : i32
    %c0_i32_0 = arith.constant 0 : i32
    return %arg1, %c0_i32 : i32, i32
  }
  func.func @transform_2(%arg0: i32, %arg1: i32) -> (i32, i32, i32) {
    %c0_i32 = arith.constant 0 : i32
    %c0_i32_0 = arith.constant 0 : i32
    %c0_i32_1 = arith.constant 0 : i32
    %c0_i32_2 = arith.constant 0 : i32
    return %c0_i32, %c0_i32_0, %c0_i32_1 : i32, i32, i32
  }
  func.func @transform_3(%arg0: i32, %arg1: i32) -> (i32, i32) {
    %c0_i32 = arith.constant 0 : i32
    %c0_i32_0 = arith.constant 0 : i32
    %c0_i32_1 = arith.constant 0 : i32
    return %c0_i32, %c0_i32_0 : i32, i32
  }
  func.func @transform_4(%arg0: i32, %arg1: i32) -> (i32, i32) {
    %c0_i32 = arith.constant 0 : i32
    return %arg0, %arg1 : i32, i32
  }
}

</mosaic_0001>

<llo_original>
// kernel: tpu_custom_call.1
$region0: #{tpu_custom_call.1}
  #allocation0 [shape = 'u32[]', space=smem, size = 0x4, offset = 0x4, fixed_abs, tag = 'smem constant byte address 0x4 - core index']
  #allocation1 [shape = 'u32[144,128]{1,0:T(1,128)}', space=vmem, size = 0x12000, scoped, tag = 'internal scratch']
  %s0 = inlined_call_operand.hbm [shape: f32[8,128], index: 0, kind: input, shape index: {}]
  %s1 = inlined_call_operand.hbm [shape: f32[8,128], index: 1, kind: input, shape index: {}]
  %s2 = inlined_call_operand.hbm [shape: f32[5,128,128], index: 2, kind: input, shape index: {}]
  %s3 = inlined_call_operand.vmem [shape: f32[8,128], index: 3, kind: input, shape index: {}]
  %s4 = inlined_call_operand.hbm [shape: f32[8,8], index: 4, kind: output, shape index: {}]
  %s5 = sld [smem:[#allocation0]]
  $region38: #{tpu_custom_call.1} parent=0
    _
  %s7 = ssub.s32 1, %s5
  %s8 = scalar_select 0, %s7, %s5
  $region1: #{tpu_custom_call.1} parent=0
    #allocation2 [shape = 'u8[4096]{0}', space=vmem, size = 0x1000, scoped, tag = 'input window, operand 0, single buffered']
    #allocation3 [shape = 's32[1]{0}', space=sflag, size = 0x4, scoped, tag = 'scoped memory for tpu_custom_call.1']
    #allocation4 [shape = 's32[1]{0}', space=sflag, size = 0x4, scoped, tag = 'scoped memory for tpu_custom_call.1']
    #allocation5 [shape = 'u8[4096]{0}', space=vmem, size = 0x1000, scoped, tag = 'input window, operand 1, single buffered']
    #allocation6 [shape = 's32[1]{0}', space=sflag, size = 0x4, scoped, tag = 'scoped memory for tpu_custom_call.1']
    #allocation7 [shape = 'u8[327680]{0}', space=vmem, size = 0x50000, scoped, tag = 'input window, operand 2, single buffered']
    #allocation8 [shape = 'u8[4096]{0}', space=vmem, size = 0x1000, scoped, tag = 'output window, operand 0, single buffered']
    %9 = vsyncpa [#allocation3], 0
    %10 = vsyncpa [#allocation6], 0
    %11 = vsyncpa [#allocation4], 0
    // Predicated region
    $region2: #{tpu_custom_call.1} parent=1 // pred_check
      _
    $region3: #{tpu_custom_call.1} parent=1 // pred_check_branch
      %13 = sbr.rel (0) target = $region5
    $region4: #{tpu_custom_call.1} parent=1 // pred_region
      %s15 = ssub.s32 128, 128
      %16 = vsyncadd [#allocation3], %s15
      %s18 = sshll.u32 [#allocation2], 4
      %s19 = int_to_ptr.vmem [resolvable:$true] %s18
      %21 = dma.hbm_to_vmem [thread:$0]  %s0, 128, %s19, [#allocation3]
    $region5: #{tpu_custom_call.1} parent=1 // pred_fallthru
      _
    // Predicated region
    $region6: #{tpu_custom_call.1} parent=1 // pred_check
      _
    $region7: #{tpu_custom_call.1} parent=1 // pred_check_branch
      %23 = sbr.rel (0) target = $region9
    $region8: #{tpu_custom_call.1} parent=1 // pred_region
      %s25 = ssub.s32 128, 128
      %26 = vsyncadd [#allocation6], %s25
      %s28 = sshll.u32 [#allocation5], 4
      %s29 = int_to_ptr.vmem [resolvable:$true] %s28
      %31 = dma.hbm_to_vmem [thread:$0]  %s1, 128, %s29, [#allocation6]
    $region9: #{tpu_custom_call.1} parent=1 // pred_fallthru
      _
    // Predicated region
    $region10: #{tpu_custom_call.1} parent=1 // pred_check
      _
    $region11: #{tpu_custom_call.1} parent=1 // pred_check_branch
      %33 = sbr.rel (0) target = $region13
    $region12: #{tpu_custom_call.1} parent=1 // pred_region
      %s35 = ssub.s32 10240, 10240
      %36 = vsyncadd [#allocation6], %s35
      %s37 = sshll.u32 [#allocation7], 4
      %s38 = int_to_ptr.vmem [resolvable:$true] %s37
      %43 = dma.hbm_to_vmem [thread:$0]  %s2, 10240, %s38, [#allocation6], 128, 128, 8
    $region13: #{tpu_custom_call.1} parent=1 // pred_fallthru
      _
    // Predicated region
    $region14: #{tpu_custom_call.1} parent=1 // pred_check
      _
    $region15: #{tpu_custom_call.1} parent=1 // pred_check_branch
      %45 = sbr.rel (0) target = $region17
    $region16: #{tpu_custom_call.1} parent=1 // pred_region
      _
    $region17: #{tpu_custom_call.1} parent=1 // pred_fallthru
      _
    // Predicated region
    $region18: #{tpu_custom_call.1} parent=1 // pred_check
      _
    $region19: #{tpu_custom_call.1} parent=1 // pred_check_branch
      %47 = sbr.rel (0) target = $region21
    $region20: #{tpu_custom_call.1} parent=1 // pred_region
      %48 = dma.done [#allocation3], 128
    $region21: #{tpu_custom_call.1} parent=1 // pred_fallthru
      _
    // Predicated region
    $region22: #{tpu_custom_call.1} parent=1 // pred_check
      _
    $region23: #{tpu_custom_call.1} parent=1 // pred_check_branch
      %50 = sbr.rel (0) target = $region25
    $region24: #{tpu_custom_call.1} parent=1 // pred_region
      %51 = dma.done [#allocation6], 128
    $region25: #{tpu_custom_call.1} parent=1 // pred_fallthru
      _
    // Predicated region
    $region26: #{tpu_custom_call.1} parent=1 // pred_check
      _
    $region27: #{tpu_custom_call.1} parent=1 // pred_check_branch
      %53 = sbr.rel (0) target = $region29
    $region28: #{tpu_custom_call.1} parent=1 // pred_region
      %54 = dma.done [#allocation6], 10240
    $region29: #{tpu_custom_call.1} parent=1 // pred_fallthru
      _
    %v55 = vld [vmem:[#allocation2] sm:$0xff]
    %v56 = vld [vmem:[#allocation5] sm:$0xff]
    %v57 = vld [vmem:[%s3] sm:$0xff]
    %v58 = vld [vmem:[#allocation7] sm:$0xff]
    %v59 = vld [vmem:[#allocation7 + $0x8] sm:$0xff]
    %v60 = vld [vmem:[#allocation7 + $0x10] sm:$0xff]
    %v61 = vld [vmem:[#allocation7 + $0x18] sm:$0xff]
    %v62 = vld [vmem:[#allocation7 + $0x20] sm:$0xff]
    %v63 = vld [vmem:[#allocation7 + $0x28] sm:$0xff]
    %v64 = vld [vmem:[#allocation7 + $0x30] sm:$0xff]
    %v65 = vld [vmem:[#allocation7 + $0x38] sm:$0xff]
    %v66 = vld [vmem:[#allocation7 + $0x40] sm:$0xff]
    %v67 = vld [vmem:[#allocation7 + $0x48] sm:$0xff]
    %v68 = vld [vmem:[#allocation7 + $0x50] sm:$0xff]
    %v69 = vld [vmem:[#allocation7 + $0x58] sm:$0xff]
    %v70 = vld [vmem:[#allocation7 + $0x60] sm:$0xff]
    %v71 = vld [vmem:[#allocation7 + $0x68] sm:$0xff]
    %v72 = vld [vmem:[#allocation7 + $0x70] sm:$0xff]
    %v73 = vld [vmem:[#allocation7 + $0x78] sm:$0xff]
    %v74 = vlaneseq
    %v75 = vshrl.u32 %v74, 7
    %v76 = vsub.s32 0, %v75
    %v77 = vrot.slane %v57, %v76
    %78 = vmatprep.subr.mxu0 0.0
    %79 = vmatpush1.msra.mxu0 %v58
    %80 = vmatprep.subr.mxu0 0.0
    %81 = vmatpush1.msra.mxu0 %v59
    %82 = vmatprep.subr.mxu0 0.0
    %83 = vmatpush1.msra.mxu0 %v60
    %84 = vmatprep.subr.mxu0 0.0
    %85 = vmatpush1.msra.mxu0 %v61
    %86 = vmatprep.subr.mxu0 0.0
    %87 = vmatpush1.msra.mxu0 %v62
    %88 = vmatprep.subr.mxu0 0.0
    %89 = vmatpush1.msra.mxu0 %v63
    %90 = vmatprep.subr.mxu0 0.0
    %91 = vmatpush1.msra.mxu0 %v64
    %92 = vmatprep.subr.mxu0 0.0
    %93 = vmatpush1.msra.mxu0 %v65
    %94 = vmatprep.subr.mxu0 0.0
    %95 = vmatpush1.msra.mxu0 %v66
    %96 = vmatprep.subr.mxu0 0.0
    %97 = vmatpush1.msra.mxu0 %v67
    %98 = vmatprep.subr.mxu0 0.0
    %99 = vmatpush1.msra.mxu0 %v68
    %100 = vmatprep.subr.mxu0 0.0
    %101 = vmatpush1.msra.mxu0 %v69
    %102 = vmatprep.subr.mxu0 0.0
    %103 = vmatpush1.msra.mxu0 %v70
    %104 = vmatprep.subr.mxu0 0.0
    %105 = vmatpush1.msra.mxu0 %v71
    %106 = vmatprep.subr.mxu0 0.0
    %107 = vmatpush1.msra.mxu0 %v72
    %108 = vmatprep.subr.mxu0 0.0
    %109 = vmatpush1.msra.mxu0 %v73
    %110 = vmatprep.subr.mxu0 0.0
    %111 = vmatpush1.msra.mxu0 0.0
    %112 = vmatprep.subr.mxu0 0.0
    %113 = vmatpush1.msra.mxu0 0.0
    %114 = vmatprep.subr.mxu0 0.0
    %115 = vmatpush1.msra.mxu0 0.0
    %116 = vmatprep.subr.mxu0 0.0
    %117 = vmatpush1.msra.mxu0 0.0
    %118 = vmatprep.subr.mxu0 0.0
    %119 = vmatpush1.msra.mxu0 0.0
    %120 = vmatprep.subr.mxu0 0.0
    %121 = vmatpush1.msra.mxu0 0.0
    %122 = vmatprep.subr.mxu0 0.0
    %123 = vmatpush1.msra.mxu0 0.0
    %124 = vmatprep.subr.mxu0 0.0
    %125 = vmatpush1.msra.mxu0 0.0
    %126 = vmatprep.subr.mxu0 0.0
    %127 = vmatpush1.msra.mxu0 0.0
    %128 = vmatprep.subr.mxu0 0.0
    %129 = vmatpush1.msra.mxu0 0.0
    %130 = vmatprep.subr.mxu0 0.0
    %131 = vmatpush1.msra.mxu0 0.0
    %132 = vmatprep.subr.mxu0 0.0
    %133 = vmatpush1.msra.mxu0 0.0
    %134 = vmatprep.subr.mxu0 0.0
    %135 = vmatpush1.msra.mxu0 0.0
    %136 = vmatprep.subr.mxu0 0.0
    %137 = vmatpush1.msra.mxu0 0.0
    %138 = vmatprep.subr.mxu0 0.0
    %139 = vmatpush1.msra.mxu0 0.0
    %140 = vmatprep.subr.mxu0 0.0
    %141 = vmatpush1.msra.mxu0 0.0
    %142 = vmatprep.mubr.f32.mxu0 0.0
    %143 = vmatmul.mubr.f32.gmra.mrb[0].mxu0 %v55
    %v144 = vpop.f32.mrb[0].mxu0
    %v145 = vadd.f32 %v77, %v144
    %v146 = vpop.f32.mrb[0].mxu0
    %147 = vdwg.mxu0
    %v148 = vtanh.pop %v145
    %s149 = scalar_lea.vmem [#allocation7], 128
    %v150 = vld [vmem:[%s149] sm:$0xff]
    %v151 = vld [vmem:[%s149 + $0x8] sm:$0xff]
    %v152 = vld [vmem:[%s149 + $0x10] sm:$0xff]
    %v153 = vld [vmem:[%s149 + $0x18] sm:$0xff]
    %v154 = vld [vmem:[%s149 + $0x20] sm:$0xff]
    %v155 = vld [vmem:[%s149 + $0x28] sm:$0xff]
    %v156 = vld [vmem:[%s149 + $0x30] sm:$0xff]
    %v157 = vld [vmem:[%s149 + $0x38] sm:$0xff]
    %v158 = vld [vmem:[%s149 + $0x40] sm:$0xff]
    %v159 = vld [vmem:[%s149 + $0x48] sm:$0xff]
    %v160 = vld [vmem:[%s149 + $0x50] sm:$0xff]
    %v161 = vld [vmem:[%s149 + $0x58] sm:$0xff]
    %v162 = vld [vmem:[%s149 + $0x60] sm:$0xff]
    %v163 = vld [vmem:[%s149 + $0x68] sm:$0xff]
    %v164 = vld [vmem:[%s149 + $0x70] sm:$0xff]
    %v165 = vld [vmem:[%s149 + $0x78] sm:$0xff]
    %v166 = vlaneseq
    %v167 = vshrl.u32 %v166, 7
    %v168 = vsub.s32 1, %v167
    %v169 = vrot.slane %v57, %v168
    %170 = vmatprep.subr.mxu0 0.0
    %171 = vmatpush1.msra.mxu0 %v150
    %172 = vmatprep.subr.mxu0 0.0
    %173 = vmatpush1.msra.mxu0 %v151
    %174 = vmatprep.subr.mxu0 0.0
    %175 = vmatpush1.msra.mxu0 %v152
    %176 = vmatprep.subr.mxu0 0.0
    %177 = vmatpush1.msra.mxu0 %v153
    %178 = vmatprep.subr.mxu0 0.0
    %179 = vmatpush1.msra.mxu0 %v154
    %180 = vmatprep.subr.mxu0 0.0
    %181 = vmatpush1.msra.mxu0 %v155
    %182 = vmatprep.subr.mxu0 0.0
    %183 = vmatpush1.msra.mxu0 %v156
    %184 = vmatprep.subr.mxu0 0.0
    %185 = vmatpush1.msra.mxu0 %v157
    %186 = vmatprep.subr.mxu0 0.0
    %187 = vmatpush1.msra.mxu0 %v158
    %188 = vmatprep.subr.mxu0 0.0
    %189 = vmatpush1.msra.mxu0 %v159
    %190 = vmatprep.subr.mxu0 0.0
    %191 = vmatpush1.msra.mxu0 %v160
    %192 = vmatprep.subr.mxu0 0.0
    %193 = vmatpush1.msra.mxu0 %v161
    %194 = vmatprep.subr.mxu0 0.0
    %195 = vmatpush1.msra.mxu0 %v162
    %196 = vmatprep.subr.mxu0 0.0
    %197 = vmatpush1.msra.mxu0 %v163
    %198 = vmatprep.subr.mxu0 0.0
    %199 = vmatpush1.msra.mxu0 %v164
    %200 = vmatprep.subr.mxu0 0.0
    %201 = vmatpush1.msra.mxu0 %v165
    %202 = vmatprep.subr.mxu0 0.0
    %203 = vmatpush1.msra.mxu0 0.0
    %204 = vmatprep.subr.mxu0 0.0
    %205 = vmatpush1.msra.mxu0 0.0
    %206 = vmatprep.subr.mxu0 0.0
    %207 = vmatpush1.msra.mxu0 0.0
    %208 = vmatprep.subr.mxu0 0.0
    %209 = vmatpush1.msra.mxu0 0.0
    %210 = vmatprep.subr.mxu0 0.0
    %211 = vmatpush1.msra.mxu0 0.0
    %212 = vmatprep.subr.mxu0 0.0
    %213 = vmatpush1.msra.mxu0 0.0
    %214 = vmatprep.subr.mxu0 0.0
    %215 = vmatpush1.msra.mxu0 0.0
    %216 = vmatprep.subr.mxu0 0.0
    %217 = vmatpush1.msra.mxu0 0.0
    %218 = vmatprep.subr.mxu0 0.0
    %219 = vmatpush1.msra.mxu0 0.0
    %220 = vmatprep.subr.mxu0 0.0
    %221 = vmatpush1.msra.mxu0 0.0
    %222 = vmatprep.subr.mxu0 0.0
    %223 = vmatpush1.msra.mxu0 0.0
    %224 = vmatprep.subr.mxu0 0.0
    %225 = vmatpush1.msra.mxu0 0.0
    %226 = vmatprep.subr.mxu0 0.0
    %227 = vmatpush1.msra.mxu0 0.0
    %228 = vmatprep.subr.mxu0 0.0
    %229 = vmatpush1.msra.mxu0 0.0
    %230 = vmatprep.subr.mxu0 0.0
    %231 = vmatpush1.msra.mxu0 0.0
    %232 = vmatprep.subr.mxu0 0.0
    %233 = vmatpush1.msra.mxu0 0.0
    %234 = vmatprep.mubr.f32.mxu0 0.0
    %235 = vmatmul.mubr.f32.gmra.mrb[0].mxu0 %v148
    %v236 = vpop.f32.mrb[0].mxu0
    %v237 = vadd.f32 %v169, %v236
    %v238 = vpop.f32.mrb[0].mxu0
    %239 = vdwg.mxu0
    %v240 = vtanh.pop %v237
    %s241 = scalar_lea.vmem [#allocation7], 256
    %v242 = vld [vmem:[%s241] sm:$0xff]
    %v243 = vld [vmem:[%s241 + $0x8] sm:$0xff]
    %v244 = vld [vmem:[%s241 + $0x10] sm:$0xff]
    %v245 = vld [vmem:[%s241 + $0x18] sm:$0xff]
    %v246 = vld [vmem:[%s241 + $0x20] sm:$0xff]
    %v247 = vld [vmem:[%s241 + $0x28] sm:$0xff]
    %v248 = vld [vmem:[%s241 + $0x30] sm:$0xff]
    %v249 = vld [vmem:[%s241 + $0x38] sm:$0xff]
    %v250 = vld [vmem:[%s241 + $0x40] sm:$0xff]
    %v251 = vld [vmem:[%s241 + $0x48] sm:$0xff]
    %v252 = vld [vmem:[%s241 + $0x50] sm:$0xff]
    %v253 = vld [vmem:[%s241 + $0x58] sm:$0xff]
    %v254 = vld [vmem:[%s241 + $0x60] sm:$0xff]
    %v255 = vld [vmem:[%s241 + $0x68] sm:$0xff]
    %v256 = vld [vmem:[%s241 + $0x70] sm:$0xff]
    %v257 = vld [vmem:[%s241 + $0x78] sm:$0xff]
    %v258 = vlaneseq
    %v259 = vshrl.u32 %v258, 7
    %v260 = vsub.s32 2, %v259
    %v261 = vrot.slane %v57, %v260
    %262 = vmatprep.subr.mxu0 0.0
    %263 = vmatpush1.msra.mxu0 %v242
    %264 = vmatprep.subr.mxu0 0.0
    %265 = vmatpush1.msra.mxu0 %v243
    %266 = vmatprep.subr.mxu0 0.0
    %267 = vmatpush1.msra.mxu0 %v244
    %268 = vmatprep.subr.mxu0 0.0
    %269 = vmatpush1.msra.mxu0 %v245
    %270 = vmatprep.subr.mxu0 0.0
    %271 = vmatpush1.msra.mxu0 %v246
    %272 = vmatprep.subr.mxu0 0.0
    %273 = vmatpush1.msra.mxu0 %v247
    %274 = vmatprep.subr.mxu0 0.0
    %275 = vmatpush1.msra.mxu0 %v248
    %276 = vmatprep.subr.mxu0 0.0
    %277 = vmatpush1.msra.mxu0 %v249
    %278 = vmatprep.subr.mxu0 0.0
    %279 = vmatpush1.msra.mxu0 %v250
    %280 = vmatprep.subr.mxu0 0.0
    %281 = vmatpush1.msra.mxu0 %v251
    %282 = vmatprep.subr.mxu0 0.0
    %283 = vmatpush1.msra.mxu0 %v252
    %284 = vmatprep.subr.mxu0 0.0
    %285 = vmatpush1.msra.mxu0 %v253
    %286 = vmatprep.subr.mxu0 0.0
    %287 = vmatpush1.msra.mxu0 %v254
    %288 = vmatprep.subr.mxu0 0.0
    %289 = vmatpush1.msra.mxu0 %v255
    %290 = vmatprep.subr.mxu0 0.0
    %291 = vmatpush1.msra.mxu0 %v256
    %292 = vmatprep.subr.mxu0 0.0
    %293 = vmatpush1.msra.mxu0 %v257
    %294 = vmatprep.subr.mxu0 0.0
    %295 = vmatpush1.msra.mxu0 0.0
    %296 = vmatprep.subr.mxu0 0.0
    %297 = vmatpush1.msra.mxu0 0.0
    %298 = vmatprep.subr.mxu0 0.0
    %299 = vmatpush1.msra.mxu0 0.0
    %300 = vmatprep.subr.mxu0 0.0
    %301 = vmatpush1.msra.mxu0 0.0
    %302 = vmatprep.subr.mxu0 0.0
    %303 = vmatpush1.msra.mxu0 0.0
    %304 = vmatprep.subr.mxu0 0.0
    %305 = vmatpush1.msra.mxu0 0.0
    %306 = vmatprep.subr.mxu0 0.0
    %307 = vmatpush1.msra.mxu0 0.0
    %308 = vmatprep.subr.mxu0 0.0
    %309 = vmatpush1.msra.mxu0 0.0
    %310 = vmatprep.subr.mxu0 0.0
    %311 = vmatpush1.msra.mxu0 0.0
    %312 = vmatprep.subr.mxu0 0.0
    %313 = vmatpush1.msra.mxu0 0.0
    %314 = vmatprep.subr.mxu0 0.0
    %315 = vmatpush1.msra.mxu0 0.0
    %316 = vmatprep.subr.mxu0 0.0
    %317 = vmatpush1.msra.mxu0 0.0
    %318 = vmatprep.subr.mxu0 0.0
    %319 = vmatpush1.msra.mxu0 0.0
    %320 = vmatprep.subr.mxu0 0.0
    %321 = vmatpush1.msra.mxu0 0.0
    %322 = vmatprep.subr.mxu0 0.0
    %323 = vmatpush1.msra.mxu0 0.0
    %324 = vmatprep.subr.mxu0 0.0
    %325 = vmatpush1.msra.mxu0 0.0
    %326 = vmatprep.mubr.f32.mxu0 0.0
    %327 = vmatmul.mubr.f32.gmra.mrb[0].mxu0 %v240
    %v328 = vpop.f32.mrb[0].mxu0
    %v329 = vadd.f32 %v261, %v328
    %v330 = vpop.f32.mrb[0].mxu0
    %331 = vdwg.mxu0
    %s332 = scalar_lea.vmem [#allocation7], 384
    %v333 = vld [vmem:[%s332] sm:$0xff]
    %v334 = vld [vmem:[%s332 + $0x8] sm:$0xff]
    %v335 = vld [vmem:[%s332 + $0x10] sm:$0xff]
    %v336 = vld [vmem:[%s332 + $0x18] sm:$0xff]
    %v337 = vld [vmem:[%s332 + $0x20] sm:$0xff]
    %v338 = vld [vmem:[%s332 + $0x28] sm:$0xff]
    %v339 = vld [vmem:[%s332 + $0x30] sm:$0xff]
    %v340 = vld [vmem:[%s332 + $0x38] sm:$0xff]
    %v341 = vld [vmem:[%s332 + $0x40] sm:$0xff]
    %v342 = vld [vmem:[%s332 + $0x48] sm:$0xff]
    %v343 = vld [vmem:[%s332 + $0x50] sm:$0xff]
    %v344 = vld [vmem:[%s332 + $0x58] sm:$0xff]
    %v345 = vld [vmem:[%s332 + $0x60] sm:$0xff]
    %v346 = vld [vmem:[%s332 + $0x68] sm:$0xff]
    %v347 = vld [vmem:[%s332 + $0x70] sm:$0xff]
    %v348 = vld [vmem:[%s332 + $0x78] sm:$0xff]
    %v349 = vlaneseq
    %v350 = vshrl.u32 %v349, 7
    %v351 = vsub.s32 3, %v350
    %v352 = vrot.slane %v57, %v351
    %353 = vmatprep.subr.mxu0 0.0
    %354 = vmatpush1.msra.mxu0 %v333
    %355 = vmatprep.subr.mxu0 0.0
    %356 = vmatpush1.msra.mxu0 %v334
    %357 = vmatprep.subr.mxu0 0.0
    %358 = vmatpush1.msra.mxu0 %v335
    %359 = vmatprep.subr.mxu0 0.0
    %360 = vmatpush1.msra.mxu0 %v336
    %361 = vmatprep.subr.mxu0 0.0
    %362 = vmatpush1.msra.mxu0 %v337
    %363 = vmatprep.subr.mxu0 0.0
    %364 = vmatpush1.msra.mxu0 %v338
    %365 = vmatprep.subr.mxu0 0.0
    %366 = vmatpush1.msra.mxu0 %v339
    %367 = vmatprep.subr.mxu0 0.0
    %368 = vmatpush1.msra.mxu0 %v340
    %369 = vmatprep.subr.mxu0 0.0
    %370 = vmatpush1.msra.mxu0 %v341
    %371 = vmatprep.subr.mxu0 0.0
    %372 = vmatpush1.msra.mxu0 %v342
    %373 = vmatprep.subr.mxu0 0.0
    %374 = vmatpush1.msra.mxu0 %v343
    %375 = vmatprep.subr.mxu0 0.0
    %376 = vmatpush1.msra.mxu0 %v344
    %377 = vmatprep.subr.mxu0 0.0
    %378 = vmatpush1.msra.mxu0 %v345
    %379 = vmatprep.subr.mxu0 0.0
    %380 = vmatpush1.msra.mxu0 %v346
    %381 = vmatprep.subr.mxu0 0.0
    %382 = vmatpush1.msra.mxu0 %v347
    %383 = vmatprep.subr.mxu0 0.0
    %384 = vmatpush1.msra.mxu0 %v348
    %385 = vmatprep.subr.mxu0 0.0
    %386 = vmatpush1.msra.mxu0 0.0
    %387 = vmatprep.subr.mxu0 0.0
    %388 = vmatpush1.msra.mxu0 0.0
    %389 = vmatprep.subr.mxu0 0.0
    %390 = vmatpush1.msra.mxu0 0.0
    %391 = vmatprep.subr.mxu0 0.0
    %392 = vmatpush1.msra.mxu0 0.0
    %393 = vmatprep.subr.mxu0 0.0
    %394 = vmatpush1.msra.mxu0 0.0
    %395 = vmatprep.subr.mxu0 0.0
    %396 = vmatpush1.msra.mxu0 0.0
    %397 = vmatprep.subr.mxu0 0.0
    %398 = vmatpush1.msra.mxu0 0.0
    %399 = vmatprep.subr.mxu0 0.0
    %400 = vmatpush1.msra.mxu0 0.0
    %401 = vmatprep.subr.mxu0 0.0
    %402 = vmatpush1.msra.mxu0 0.0
    %403 = vmatprep.subr.mxu0 0.0
    %404 = vmatpush1.msra.mxu0 0.0
    %405 = vmatprep.subr.mxu0 0.0
    %406 = vmatpush1.msra.mxu0 0.0
    %407 = vmatprep.subr.mxu0 0.0
    %408 = vmatpush1.msra.mxu0 0.0
    %409 = vmatprep.subr.mxu0 0.0
    %410 = vmatpush1.msra.mxu0 0.0
    %411 = vmatprep.subr.mxu0 0.0
    %412 = vmatpush1.msra.mxu0 0.0
    %413 = vmatprep.subr.mxu0 0.0
    %414 = vmatpush1.msra.mxu0 0.0
    %415 = vmatprep.subr.mxu0 0.0
    %416 = vmatpush1.msra.mxu0 0.0
    %417 = vmatprep.mubr.f32.mxu0 0.0
    %418 = vmatmul.mubr.f32.gmra.mrb[0].mxu0 %v56
    %v419 = vpop.f32.mrb[0].mxu0
    %v420 = vadd.f32 %v352, %v419
    %v421 = vpop.f32.mrb[0].mxu0
    %422 = vdwg.mxu0
    %v423 = vtanh.pop %v420
    %s424 = scalar_lea.vmem [#allocation7], 512
    %v425 = vld [vmem:[%s424] sm:$0xff]
    %v426 = vld [vmem:[%s424 + $0x8] sm:$0xff]
    %v427 = vld [vmem:[%s424 + $0x10] sm:$0xff]
    %v428 = vld [vmem:[%s424 + $0x18] sm:$0xff]
    %v429 = vld [vmem:[%s424 + $0x20] sm:$0xff]
    %v430 = vld [vmem:[%s424 + $0x28] sm:$0xff]
    %v431 = vld [vmem:[%s424 + $0x30] sm:$0xff]
    %v432 = vld [vmem:[%s424 + $0x38] sm:$0xff]
    %v433 = vld [vmem:[%s424 + $0x40] sm:$0xff]
    %v434 = vld [vmem:[%s424 + $0x48] sm:$0xff]
    %v435 = vld [vmem:[%s424 + $0x50] sm:$0xff]
    %v436 = vld [vmem:[%s424 + $0x58] sm:$0xff]
    %v437 = vld [vmem:[%s424 + $0x60] sm:$0xff]
    %v438 = vld [vmem:[%s424 + $0x68] sm:$0xff]
    %v439 = vld [vmem:[%s424 + $0x70] sm:$0xff]
    %v440 = vld [vmem:[%s424 + $0x78] sm:$0xff]
    %v441 = vlaneseq
    %v442 = vshrl.u32 %v441, 7
    %v443 = vsub.s32 4, %v442
    %v444 = vrot.slane %v57, %v443
    %445 = vmatprep.subr.mxu0 0.0
    %446 = vmatpush1.msra.mxu0 %v425
    %447 = vmatprep.subr.mxu0 0.0
    %448 = vmatpush1.msra.mxu0 %v426
    %449 = vmatprep.subr.mxu0 0.0
    %450 = vmatpush1.msra.mxu0 %v427
    %451 = vmatprep.subr.mxu0 0.0
    %452 = vmatpush1.msra.mxu0 %v428
    %453 = vmatprep.subr.mxu0 0.0
    %454 = vmatpush1.msra.mxu0 %v429
    %455 = vmatprep.subr.mxu0 0.0
    %456 = vmatpush1.msra.mxu0 %v430
    %457 = vmatprep.subr.mxu0 0.0
    %458 = vmatpush1.msra.mxu0 %v431
    %459 = vmatprep.subr.mxu0 0.0
    %460 = vmatpush1.msra.mxu0 %v432
    %461 = vmatprep.subr.mxu0 0.0
    %462 = vmatpush1.msra.mxu0 %v433
    %463 = vmatprep.subr.mxu0 0.0
    %464 = vmatpush1.msra.mxu0 %v434
    %465 = vmatprep.subr.mxu0 0.0
    %466 = vmatpush1.msra.mxu0 %v435
    %467 = vmatprep.subr.mxu0 0.0
    %468 = vmatpush1.msra.mxu0 %v436
    %469 = vmatprep.subr.mxu0 0.0
    %470 = vmatpush1.msra.mxu0 %v437
    %471 = vmatprep.subr.mxu0 0.0
    %472 = vmatpush1.msra.mxu0 %v438
    %473 = vmatprep.subr.mxu0 0.0
    %474 = vmatpush1.msra.mxu0 %v439
    %475 = vmatprep.subr.mxu0 0.0
    %476 = vmatpush1.msra.mxu0 %v440
    %477 = vmatprep.subr.mxu0 0.0
    %478 = vmatpush1.msra.mxu0 0.0
    %479 = vmatprep.subr.mxu0 0.0
    %480 = vmatpush1.msra.mxu0 0.0
    %481 = vmatprep.subr.mxu0 0.0
    %482 = vmatpush1.msra.mxu0 0.0
    %483 = vmatprep.subr.mxu0 0.0
    %484 = vmatpush1.msra.mxu0 0.0
    %485 = vmatprep.subr.mxu0 0.0
    %486 = vmatpush1.msra.mxu0 0.0
    %487 = vmatprep.subr.mxu0 0.0
    %488 = vmatpush1.msra.mxu0 0.0
    %489 = vmatprep.subr.mxu0 0.0
    %490 = vmatpush1.msra.mxu0 0.0
    %491 = vmatprep.subr.mxu0 0.0
    %492 = vmatpush1.msra.mxu0 0.0
    %493 = vmatprep.subr.mxu0 0.0
    %494 = vmatpush1.msra.mxu0 0.0
    %495 = vmatprep.subr.mxu0 0.0
    %496 = vmatpush1.msra.mxu0 0.0
    %497 = vmatprep.subr.mxu0 0.0
    %498 = vmatpush1.msra.mxu0 0.0
    %499 = vmatprep.subr.mxu0 0.0
    %500 = vmatpush1.msra.mxu0 0.0
    %501 = vmatprep.subr.mxu0 0.0
    %502 = vmatpush1.msra.mxu0 0.0
    %503 = vmatprep.subr.mxu0 0.0
    %504 = vmatpush1.msra.mxu0 0.0
    %505 = vmatprep.subr.mxu0 0.0
    %506 = vmatpush1.msra.mxu0 0.0
    %507 = vmatprep.subr.mxu0 0.0
    %508 = vmatpush1.msra.mxu0 0.0
    %509 = vmatprep.mubr.f32.mxu0 0.0
    %510 = vmatmul.mubr.f32.gmra.mrb[0].mxu0 %v423
    %v511 = vpop.f32.mrb[0].mxu0
    %v512 = vadd.f32 %v444, %v511
    %v513 = vpop.f32.mrb[0].mxu0
    %514 = vdwg.mxu0
    %515 = vmatprep.subr.mxu0 0.0
    %516 = vmatpush1.xpose.msra.mxu0 %v512
    %517 = vmatprep.subr.mxu0 0.0
    %518 = vmatpush1.xpose.msra.mxu0 0.0
    %519 = vmatprep.subr.mxu0 0.0
    %520 = vmatpush1.xpose.msra.mxu0 0.0
    %521 = vmatprep.subr.mxu0 0.0
    %522 = vmatpush1.xpose.msra.mxu0 0.0
    %523 = vmatprep.subr.mxu0 0.0
    %524 = vmatpush1.xpose.msra.mxu0 0.0
    %525 = vmatprep.subr.mxu0 0.0
    %526 = vmatpush1.xpose.msra.mxu0 0.0
    %527 = vmatprep.subr.mxu0 0.0
    %528 = vmatpush1.xpose.msra.mxu0 0.0
    %529 = vmatprep.subr.mxu0 0.0
    %530 = vmatpush1.xpose.msra.mxu0 0.0
    %531 = vmatprep.subr.mxu0 0.0
    %532 = vmatpush1.xpose.msra.mxu0 0.0
    %533 = vmatprep.subr.mxu0 0.0
    %534 = vmatpush1.xpose.msra.mxu0 0.0
    %535 = vmatprep.subr.mxu0 0.0
    %536 = vmatpush1.xpose.msra.mxu0 0.0
    %537 = vmatprep.subr.mxu0 0.0
    %538 = vmatpush1.xpose.msra.mxu0 0.0
    %539 = vmatprep.subr.mxu0 0.0
    %540 = vmatpush1.xpose.msra.mxu0 0.0
    %541 = vmatprep.subr.mxu0 0.0
    %542 = vmatpush1.xpose.msra.mxu0 0.0
    %543 = vmatprep.subr.mxu0 0.0
    %544 = vmatpush1.xpose.msra.mxu0 0.0
    %545 = vmatprep.subr.mxu0 0.0
    %546 = vmatpush1.xpose.msra.mxu0 0.0
    %547 = vmatprep.subr.mxu0 0.0
    %548 = vmatpush1.xpose.msra.mxu0 0.0
    %549 = vmatprep.subr.mxu0 0.0
    %550 = vmatpush1.xpose.msra.mxu0 0.0
    %551 = vmatprep.subr.mxu0 0.0
    %552 = vmatpush1.xpose.msra.mxu0 0.0
    %553 = vmatprep.subr.mxu0 0.0
    %554 = vmatpush1.xpose.msra.mxu0 0.0
    %555 = vmatprep.subr.mxu0 0.0
    %556 = vmatpush1.xpose.msra.mxu0 0.0
    %557 = vmatprep.subr.mxu0 0.0
    %558 = vmatpush1.xpose.msra.mxu0 0.0
    %559 = vmatprep.subr.mxu0 0.0
    %560 = vmatpush1.xpose.msra.mxu0 0.0
    %561 = vmatprep.subr.mxu0 0.0
    %562 = vmatpush1.xpose.msra.mxu0 0.0
    %563 = vmatprep.subr.mxu0 0.0
    %564 = vmatpush1.xpose.msra.mxu0 0.0
    %565 = vmatprep.subr.mxu0 0.0
    %566 = vmatpush1.xpose.msra.mxu0 0.0
    %567 = vmatprep.subr.mxu0 0.0
    %568 = vmatpush1.xpose.msra.mxu0 0.0
    %569 = vmatprep.subr.mxu0 0.0
    %570 = vmatpush1.xpose.msra.mxu0 0.0
    %571 = vmatprep.subr.mxu0 0.0
    %572 = vmatpush1.xpose.msra.mxu0 0.0
    %573 = vmatprep.subr.mxu0 0.0
    %574 = vmatpush1.xpose.msra.mxu0 0.0
    %575 = vmatprep.subr.mxu0 0.0
    %576 = vmatpush1.xpose.msra.mxu0 0.0
    %577 = vmatprep.subr.mxu0 0.0
    %578 = vmatpush1.xpose.msra.mxu0 0.0
    %579 = vmatprep.mubr.f32.mxu0 0.0
    %580 = vmatmul.mubr.f32.gmra.mrb[0].mxu0 %v329
    %v581 = vpop.f32.mrb[0].mxu0
    %v582 = vadd.f32 0.0, %v581
    %v583 = vpop.f32.mrb[0].mxu0
    %584 = vdwg.mxu0
    %vm585 = vcmask 64512
    %586 = vst.msk [vmem:[#allocation8] sm:$0xff] %vm585, %v582
    // Predicated region
    $region30: #{tpu_custom_call.1} parent=1 // pred_check
      _
    $region31: #{tpu_custom_call.1} parent=1 // pred_check_branch
      %588 = sbr.rel (0) target = $region33
    $region32: #{tpu_custom_call.1} parent=1 // pred_region
      %s590 = ssub.s32 128, 128
      %591 = vsyncadd [#allocation4], %s590
      %s593 = sshll.u32 [#allocation8], 4
      %s594 = int_to_ptr.vmem [resolvable:$true] %s593
      %596 = dma.vmem_to_hbm [thread:$0]  %s594, 128, %s4, [#allocation4]
    $region33: #{tpu_custom_call.1} parent=1 // pred_fallthru
      _
    // Predicated region
    $region34: #{tpu_custom_call.1} parent=1 // pred_check
      _
    $region35: #{tpu_custom_call.1} parent=1 // pred_check_branch
      %598 = sbr.rel (0) target = $region37
    $region36: #{tpu_custom_call.1} parent=1 // pred_region
      %599 = dma.done [#allocation4], 128
    $region37: #{tpu_custom_call.1} parent=1 // pred_fallthru
      _
    %600 = vsyncpa [#allocation3], 1
    %601 = vsyncpa [#allocation6], 1
    %602 = vsyncpa [#allocation4], 1

</llo_original>
